<compile_context>
chip_gen: v6e
topology: v6e:2x2x1
jax: 0.10.0
libtpu: 0.0.40
codegen_flags: <defaults>
</compile_context>

<pallas_src>
import functools

import jax
import jax.numpy as jnp
from jax.experimental import pallas as pl
from jax.experimental.pallas import tpu as pltpu

EPS = 1e-6
LANE = 128
SUBLANE = 8
MAX_TILE_ROWS = 512                   # multiple of 8; fills the 256-wide MXU M
W_RESIDENT_BYTES = 8 * 1024 * 1024    # keep whole bf16 W stack resident when <= this


def _round_up(n, m):
    return ((n + m - 1) // m) * m


def _cdiv(a, b):
    return -(-a // b)


def _layernorm(x, a2, b2, d_valid, valid_mask):
    """Torch-style LayerNorm: a2 * (x - mean) / (std + eps) + b2, UNBIASED std.

    x: (T, Dp) f32 with padded columns (>= d_valid) exactly zero.
    a2/b2: (1, Dp), zero on padded columns (so padded output columns stay 0).
    """
    # Padded columns are exactly zero, so the plain sum is the real-column sum.
    mean = jnp.sum(x, axis=-1, keepdims=True) * (1.0 / d_valid)
    centered = x - mean
    if valid_mask is not None:
        centered = jnp.where(valid_mask, centered, 0.0)
    # Unbiased variance (divide by D-1) to match torch.Tensor.std().
    var_unbiased = jnp.sum(centered * centered, axis=-1, keepdims=True) * (
        1.0 / (d_valid - 1)
    )
    std = jnp.sqrt(var_unbiased)
    # EUP fast-path reciprocal (~2^-12 rel err) — off the VALU critical path.
    inv = pl.reciprocal(std + EPS, approx=True)
    return a2 * (centered * inv) + b2


def encoder_kernel(x_ref, vec_ref, w_ref, o_ref, cur_ref, *, d_valid, w_resident):
    l = pl.program_id(1)
    n_layers = pl.num_programs(1)
    dp = x_ref.shape[-1]

    # Column-validity mask for the padded feature axis, built once per step
    # (static branch — omitted entirely when D is already lane-dense).
    if d_valid != dp:
        col = jax.lax.broadcasted_iota(jnp.int32, x_ref.shape, 1)
        valid = col < d_valid
    else:
        valid = None

    @pl.when(l == 0)
    def _():
        # Load the row tile once; it stays resident in f32 scratch across the
        # whole layer stack (layer axis is the innermost grid dimension).
        cur_ref[...] = x_ref[...].astype(jnp.float32)

    x = cur_ref[...]

    # Per-layer packed params: vec_ref[l] = [a_2 ; b_2 ; bias], each (1, Dp).
    pv = vec_ref[l]
    a2 = pv[0:1, :]
    b2 = pv[1:2, :]
    bias = pv[2:3, :]

    # Pre-norm residual block: x + dense(LayerNorm_l(x))   (dropout = identity).
    normed = _layernorm(x, a2, b2, d_valid, valid)
    w = w_ref[l] if w_resident else w_ref[0]          # bf16 (Dp, Dp)
    sub = jnp.dot(normed.astype(jnp.bfloat16), w,
                  preferred_element_type=jnp.float32) + bias
    new_x = x + sub

    @pl.when(l != n_layers - 1)
    def _():
        # Carry store skipped on the final layer (v5e has one vst slot/bundle).
        cur_ref[...] = new_x

    @pl.when(l == n_layers - 1)
    def _():
        # Encoder.norm: final LayerNorm; single lane-dense store per row tile.
        fv = vec_ref[vec_ref.shape[0] - 1]            # static index: final-LN slot
        o_ref[...] = _layernorm(new_x, fv[0:1, :], fv[1:2, :],
                                d_valid, valid).astype(o_ref.dtype)


def prepare_encoder_params(layer_a2, layer_b2, layer_w, layer_b,
                           final_a2, final_b2):
    """One-time (per model) padding + bf16 cast of the Encoder parameters.

    Hoisted out of the forward path so per-call work touches only x.
    """
    n_layers, D, _ = layer_w.shape
    assert D >= 2, "d_model must be >= 2 (unbiased std divides by D-1)"
    Dp = _round_up(D, LANE)
    f32 = jnp.float32

    # Packed small vectors: slot l < n_layers -> (a2_l, b2_l, bias_l);
    # slot n_layers -> (final_a2, final_b2, 0).  Zero padding keeps padded
    # feature columns exactly zero through every layer.
    vec = jnp.zeros((n_layers + 1, 3, Dp), f32)
    vec = vec.at[:n_layers, 0, :D].set(layer_a2.astype(f32))
    vec = vec.at[:n_layers, 1, :D].set(layer_b2.astype(f32))
    vec = vec.at[:n_layers, 2, :D].set(layer_b.astype(f32))
    vec = vec.at[n_layers, 0, :D].set(final_a2.astype(f32))
    vec = vec.at[n_layers, 1, :D].set(final_b2.astype(f32))

    # bf16 weights: fast MXU path, half the DMA bytes and VMEM footprint.
    wp = jnp.zeros((n_layers, Dp, Dp), jnp.bfloat16)
    wp = wp.at[:, :D, :D].set(layer_w.astype(jnp.bfloat16))

    return {"vec": vec, "w": wp, "d_model": D, "n_layers": n_layers}


def encoder_forward(x, params, mask=None):
    """Encoder.forward(x, mask). x: (B, S, D); params from prepare_encoder_params."""
    del mask  # TODO(synk): mask unused — surrogate dense sublayer has no attention.
    vec, wp = params["vec"], params["w"]
    D = params["d_model"]
    n_layers = params["n_layers"]
    B, S, _ = x.shape
    N = B * S
    Dp = wp.shape[-1]

    # Row tile: as large as MAX_TILE_ROWS, chosen to minimize row padding.
    n_tiles = max(1, _cdiv(N, MAX_TILE_ROWS))
    tile_n = _round_up(_cdiv(N, n_tiles), SUBLANE)
    Np = n_tiles * tile_n

    # Fast path: no HBM padding copies when shapes are already aligned.
    x_flat = x.reshape(N, D)
    aligned = (D == Dp) and (Np == N)
    if aligned:
        x2 = x_flat
    else:
        x2 = jnp.zeros((Np, Dp), x.dtype).at[:N, :D].set(x_flat)

    # Weight stack resident in VMEM when small enough, otherwise streamed per layer.
    w_resident = wp.size * wp.dtype.itemsize <= W_RESIDENT_BYTES
    if w_resident:
        w_spec = pl.BlockSpec((n_layers, Dp, Dp), lambda i, l: (0, 0, 0))
    else:
        w_spec = pl.BlockSpec((1, Dp, Dp), lambda i, l: (l, 0, 0))

    # VMEM budget from actual buffer sizes (double-buffered blocks + scratch),
    # with headroom.  Clamped to stay inside v5e/v6e physical VMEM; for v7x
    # (64 MiB) large d_model should switch to streamed/K-tiled weights.
    itemsize = x.dtype.itemsize
    bytes_needed = (
        2 * tile_n * Dp * itemsize            # x blocks
        + 2 * tile_n * Dp * itemsize          # out blocks
        + tile_n * Dp * 4                     # f32 carry scratch
        + 2 * vec.size * 4                    # packed LN / bias vectors
        + 2 * (wp.size if w_resident else Dp * Dp) * 2   # bf16 weights
    )
    vmem_limit = min(max(2 * bytes_needed + (4 << 20), 32 << 20), 96 << 20)

    grid = (Np // tile_n, n_layers)  # rows parallel, layer stack innermost

    out = pl.pallas_call(
        functools.partial(encoder_kernel, d_valid=D, w_resident=w_resident),
        out_shape=jax.ShapeDtypeStruct((Np, Dp), x.dtype),
        grid_spec=pltpu.PrefetchScalarGridSpec(
            num_scalar_prefetch=0,
            grid=grid,
            in_specs=[
                pl.BlockSpec((tile_n, Dp), lambda i, l: (i, 0)),            # x row tile
                pl.BlockSpec((n_layers + 1, 3, Dp), lambda i, l: (0, 0, 0)),  # LN/bias (resident)
                w_spec,                                                     # bf16 weights
            ],
            out_specs=pl.BlockSpec((tile_n, Dp), lambda i, l: (i, 0)),
            scratch_shapes=[pltpu.VMEM((tile_n, Dp), jnp.float32)],
        ),
        compiler_params=pltpu.CompilerParams(
            dimension_semantics=("parallel", "arbitrary"),
            vmem_limit_bytes=vmem_limit,
        ),
    )(x2, vec, wp)

    if aligned:
        return out.reshape(B, S, D)
    return out[:N, :D].reshape(B, S, D)


def reference(x, layer_a2, layer_b2, layer_w, layer_b, final_a2, final_b2):
    """Pure-JAX (f32) mirror of the PyTorch forward (eval mode, dense sublayer)."""
    def ln(v, a2, b2):
        d = v.shape[-1]
        mean = jnp.mean(v, axis=-1, keepdims=True)
        var = jnp.sum((v - mean) ** 2, axis=-1, keepdims=True) / (d - 1)
        std = jnp.sqrt(var)
        return a2 * (v - mean) / (std + EPS) + b2

    for l in range(layer_w.shape[0]):
        normed = ln(x, layer_a2[l], layer_b2[l])
        x = x + jnp.einsum("bsd,de->bse", normed, layer_w[l]) + layer_b[l]
    return ln(x, final_a2, final_b2)


if __name__ == "__main__":
    B, S, D = 2, 8, 32       # batch, seq, d_model
    N_LAYERS = 2             # Encoder depth

    key = jax.random.PRNGKey(0)
    kx, kw, kb = jax.random.split(key, 3)

    x = jax.random.normal(kx, (B, S, D), dtype=jnp.float32)

    # Per-layer LayerNorm params (initialized as in LayerNorm.__init__) and
    # deterministic synthetic dense-sublayer params.
    layer_a2 = jnp.ones((N_LAYERS, D), dtype=jnp.float32)
    layer_b2 = jnp.zeros((N_LAYERS, D), dtype=jnp.float32)
    layer_w = jax.random.normal(kw, (N_LAYERS, D, D), dtype=jnp.float32) * 0.02
    layer_b = jax.random.normal(kb, (N_LAYERS, D), dtype=jnp.float32) * 0.02
    # Final Encoder.norm params.
    final_a2 = jnp.ones((D,), dtype=jnp.float32)
    final_b2 = jnp.zeros((D,), dtype=jnp.float32)

    params = prepare_encoder_params(layer_a2, layer_b2, layer_w, layer_b,
                                    final_a2, final_b2)
    out = encoder_forward(x, params, mask=None)
    jax.block_until_ready(out)

    ref = reference(x, layer_a2, layer_b2, layer_w, layer_b, final_a2, final_b2)
    assert out.shape == (B, S, D)
    # Tolerance loosened for bf16 matmul + approx (EUP) reciprocal.
    assert jnp.allclose(out, ref, atol=1e-2, rtol=1e-2), "mismatch vs reference"

    print("KERNEL_OK")
</pallas_src>

<mosaic_0001>
module attributes {stable_mosaic.version = 11 : i64} {
  func.func @encoder_kernel(%arg0: i32, %arg1: i32, %arg2: memref<16x128xf32, #tpu.memory_space<vmem>>, %arg3: memref<3x3x128xf32, #tpu.memory_space<vmem>>, %arg4: memref<2x128x128xbf16, #tpu.memory_space<vmem>>, %arg5: memref<16x128xf32, #tpu.memory_space<vmem>>, %arg6: memref<16x128xf32, #tpu.memory_space<vmem>>) attributes {dimension_semantics = [#tpu.dimension_semantics<parallel>, #tpu.dimension_semantics<arbitrary>], iteration_bounds = array<i64: 1, 2>, scalar_prefetch = 0 : i64, scratch_operands = 1 : i64, tpu.core_type = #tpu.core_type<tc>, window_params = [{transform_indices = @transform_0, window_bounds = array<i64: 16, 128>}, {pipeline_mode = #tpu.pipeline_mode<synchronous>, transform_indices = @transform_1, window_bounds = array<i64: 3, 3, 128>}, {pipeline_mode = #tpu.pipeline_mode<synchronous>, transform_indices = @transform_2, window_bounds = array<i64: 2, 128, 128>}, {transform_indices = @transform_3, window_bounds = array<i64: 16, 128>}]} {
    %0 = tpu.iota {dimensions = array<i32: 1>} : vector<16x128xi32>
    %c32_i32 = arith.constant 32 : i32
    %1 = vector.broadcast %c32_i32 : i32 to vector<16x128xi32>
    %2 = arith.cmpi slt, %0, %1 : vector<16x128xi32>
    %c0_i32 = arith.constant 0 : i32
    %3 = arith.cmpi eq, %arg1, %c0_i32 : i32
    %4 = arith.extui %3 : i1 to i32
    %c0_i32_0 = arith.constant 0 : i32
    %5 = arith.cmpi ne, %4, %c0_i32_0 : i32
    scf.if %5 {
      %c0_15 = arith.constant 0 : index
      %c0_16 = arith.constant 0 : index
      %50 = vector.load %arg2[%c0_15, %c0_16] : memref<16x128xf32, #tpu.memory_space<vmem>>, vector<16x128xf32>
      %c0_17 = arith.constant 0 : index
      %c0_18 = arith.constant 0 : index
      %51 = vector.load %arg6[%c0_17, %c0_18] : memref<16x128xf32, #tpu.memory_space<vmem>>, vector<16x128xf32>
      tpu.vector_store %arg6[%c0_17, %c0_18], %50 {strides = array<i32>} : memref<16x128xf32, #tpu.memory_space<vmem>>, vector<16x128xf32>,
    } else {
    }
    %c0 = arith.constant 0 : index
    %c0_1 = arith.constant 0 : index
    %6 = vector.load %arg6[%c0, %c0_1] : memref<16x128xf32, #tpu.memory_space<vmem>>, vector<16x128xf32>
    %7 = arith.index_cast %arg1 : i32 to index
    %c0_2 = arith.constant 0 : index
    %c0_3 = arith.constant 0 : index
    %8 = vector.load %arg3[%7, %c0_2, %c0_3] : memref<3x3x128xf32, #tpu.memory_space<vmem>>, vector<1x3x128xf32>
    %9 = vector.shape_cast %8 : vector<1x3x128xf32> to vector<3x128xf32>
    %10 = vector.extract_strided_slice %9 {offsets = [0, 0], sizes = [1, 128], strides = [1, 1]} : vector<3x128xf32> to vector<1x128xf32>
    %11 = vector.extract_strided_slice %9 {offsets = [1, 0], sizes = [1, 128], strides = [1, 1]} : vector<3x128xf32> to vector<1x128xf32>
    %12 = vector.extract_strided_slice %9 {offsets = [2, 0], sizes = [1, 128], strides = [1, 1]} : vector<3x128xf32> to vector<1x128xf32>
    %cst = arith.constant dense<0.000000e+00> : vector<16xf32>
    %13 = vector.multi_reduction <add>, %6, %cst [1] : vector<16x128xf32> to vector<16xf32>
    %14 = vector.shape_cast %13 : vector<16xf32> to vector<16x1xf32>
    %cst_4 = arith.constant 3.125000e-02 : f32
    %15 = vector.broadcast %cst_4 : f32 to vector<16x1xf32>
    %16 = arith.mulf %14, %15 : vector<16x1xf32>
    %17 = vector.broadcast %16 : vector<16x1xf32> to vector<16x128xf32>
    %18 = arith.subf %6, %17 : vector<16x128xf32>
    %cst_5 = arith.constant 0.000000e+00 : f32
    %19 = vector.broadcast %cst_5 : f32 to vector<16x128xf32>
    %20 = arith.select %2, %18, %19 : vector<16x128xi1>, vector<16x128xf32>
    %21 = arith.mulf %20, %20 : vector<16x128xf32>
    %cst_6 = arith.constant dense<0.000000e+00> : vector<16xf32>
    %22 = vector.multi_reduction <add>, %21, %cst_6 [1] : vector<16x128xf32> to vector<16xf32>
    %23 = vector.shape_cast %22 : vector<16xf32> to vector<16x1xf32>
    %cst_7 = arith.constant 0.0322580636 : f32
    %24 = vector.broadcast %cst_7 : f32 to vector<16x1xf32>
    %25 = arith.mulf %23, %24 : vector<16x1xf32>
    %26 = math.sqrt %25 : vector<16x1xf32>
    %cst_8 = arith.constant 9.99999997E-7 : f32
    %27 = vector.broadcast %cst_8 : f32 to vector<16x1xf32>
    %28 = arith.addf %26, %27 : vector<16x1xf32>
    %29 = tpu.reciprocal %28 {approx = true} : vector<16x1xf32> -> vector<16x1xf32>
    %30 = vector.broadcast %29 : vector<16x1xf32> to vector<16x128xf32>
    %31 = arith.mulf %20, %30 : vector<16x128xf32>
    %32 = vector.broadcast %10 : vector<1x128xf32> to vector<16x128xf32>
    %33 = arith.mulf %32, %31 : vector<16x128xf32>
    %34 = vector.broadcast %11 : vector<1x128xf32> to vector<16x128xf32>
    %35 = arith.addf %33, %34 : vector<16x128xf32>
    %36 = arith.index_cast %arg1 : i32 to index
    %c0_9 = arith.constant 0 : index
    %c0_10 = arith.constant 0 : index
    %37 = vector.load %arg4[%36, %c0_9, %c0_10] : memref<2x128x128xbf16, #tpu.memory_space<vmem>>, vector<1x128x128xbf16>
    %38 = vector.shape_cast %37 : vector<1x128x128xbf16> to vector<128x128xbf16>
    %39 = arith.truncf %35 : vector<16x128xf32> to vector<16x128xbf16>
    %cst_11 = arith.constant dense<0.000000e+00> : vector<16x128xf32>
    %40 = tpu.matmul %39, %38, %cst_11 {dimension_numbers = #tpu.dot_dimension_numbers<[1], [0], [0], [1], [0, 0, 1, 1], [], []>} : vector<16x128xbf16>, vector<128x128xbf16>, vector<16x128xf32> -> vector<16x128xf32>
    %41 = vector.broadcast %12 : vector<1x128xf32> to vector<16x128xf32>
    %42 = arith.addf %40, %41 : vector<16x128xf32>
    %43 = arith.addf %6, %42 : vector<16x128xf32>
    %c1_i32 = arith.constant 1 : i32
    %44 = arith.cmpi ne, %arg1, %c1_i32 : i32
    %45 = arith.extui %44 : i1 to i32
    %c0_i32_12 = arith.constant 0 : i32
    %46 = arith.cmpi ne, %45, %c0_i32_12 : i32
    scf.if %46 {
      %c0_15 = arith.constant 0 : index
      %c0_16 = arith.constant 0 : index
      %50 = vector.load %arg6[%c0_15, %c0_16] : memref<16x128xf32, #tpu.memory_space<vmem>>, vector<16x128xf32>
      tpu.vector_store %arg6[%c0_15, %c0_16], %43 {strides = array<i32>} : memref<16x128xf32, #tpu.memory_space<vmem>>, vector<16x128xf32>,
    } else {
    }
    %c1_i32_13 = arith.constant 1 : i32
    %47 = arith.cmpi eq, %arg1, %c1_i32_13 : i32
    %48 = arith.extui %47 : i1 to i32
    %c0_i32_14 = arith.constant 0 : i32
    %49 = arith.cmpi ne, %48, %c0_i32_14 : i32
    scf.if %49 {
      %c2 = arith.constant 2 : index
      %c0_15 = arith.constant 0 : index
      %c0_16 = arith.constant 0 : index
      %50 = vector.load %arg3[%c2, %c0_15, %c0_16] : memref<3x3x128xf32, #tpu.memory_space<vmem>>, vector<1x3x128xf32>
      %51 = vector.shape_cast %50 : vector<1x3x128xf32> to vector<3x128xf32>
      %52 = vector.extract_strided_slice %51 {offsets = [0, 0], sizes = [1, 128], strides = [1, 1]} : vector<3x128xf32> to vector<1x128xf32>
      %53 = vector.extract_strided_slice %51 {offsets = [1, 0], sizes = [1, 128], strides = [1, 1]} : vector<3x128xf32> to vector<1x128xf32>
      %cst_17 = arith.constant dense<0.000000e+00> : vector<16xf32>
      %54 = vector.multi_reduction <add>, %43, %cst_17 [1] : vector<16x128xf32> to vector<16xf32>
      %55 = vector.shape_cast %54 : vector<16xf32> to vector<16x1xf32>
      %cst_18 = arith.constant 3.125000e-02 : f32
      %56 = vector.broadcast %cst_18 : f32 to vector<16x1xf32>
      %57 = arith.mulf %55, %56 : vector<16x1xf32>
      %58 = vector.broadcast %57 : vector<16x1xf32> to vector<16x128xf32>
      %59 = arith.subf %43, %58 : vector<16x128xf32>
      %cst_19 = arith.constant 0.000000e+00 : f32
      %60 = vector.broadcast %cst_19 : f32 to vector<16x128xf32>
      %61 = arith.select %2, %59, %60 : vector<16x128xi1>, vector<16x128xf32>
      %62 = arith.mulf %61, %61 : vector<16x128xf32>
      %cst_20 = arith.constant dense<0.000000e+00> : vector<16xf32>
      %63 = vector.multi_reduction <add>, %62, %cst_20 [1] : vector<16x128xf32> to vector<16xf32>
      %64 = vector.shape_cast %63 : vector<16xf32> to vector<16x1xf32>
      %cst_21 = arith.constant 0.0322580636 : f32
      %65 = vector.broadcast %cst_21 : f32 to vector<16x1xf32>
      %66 = arith.mulf %64, %65 : vector<16x1xf32>
      %67 = math.sqrt %66 : vector<16x1xf32>
      %cst_22 = arith.constant 9.99999997E-7 : f32
      %68 = vector.broadcast %cst_22 : f32 to vector<16x1xf32>
      %69 = arith.addf %67, %68 : vector<16x1xf32>
      %70 = tpu.reciprocal %69 {approx = true} : vector<16x1xf32> -> vector<16x1xf32>
      %71 = vector.broadcast %70 : vector<16x1xf32> to vector<16x128xf32>
      %72 = arith.mulf %61, %71 : vector<16x128xf32>
      %73 = vector.broadcast %52 : vector<1x128xf32> to vector<16x128xf32>
      %74 = arith.mulf %73, %72 : vector<16x128xf32>
      %75 = vector.broadcast %53 : vector<1x128xf32> to vector<16x128xf32>
      %76 = arith.addf %74, %75 : vector<16x128xf32>
      %c0_23 = arith.constant 0 : index
      %c0_24 = arith.constant 0 : index
      %77 = vector.load %arg5[%c0_23, %c0_24] : memref<16x128xf32, #tpu.memory_space<vmem>>, vector<16x128xf32>
      tpu.vector_store %arg5[%c0_23, %c0_24], %76 {strides = array<i32>} : memref<16x128xf32, #tpu.memory_space<vmem>>, vector<16x128xf32>,
    } else {
    }
    return
  }
  func.func @transform_0(%arg0: i32, %arg1: i32) -> (i32, i32) {
    %c0_i32 = arith.constant 0 : i32
    %c0_i32_0 = arith.constant 0 : i32
    return %arg0, %c0_i32 : i32, i32
  }
  func.func @transform_1(%arg0: i32, %arg1: i32) -> (i32, i32, i32) {
    %c0_i32 = arith.constant 0 : i32
    %c0_i32_0 = arith.constant 0 : i32
    %c0_i32_1 = arith.constant 0 : i32
    %c0_i32_2 = arith.constant 0 : i32
    return %c0_i32, %c0_i32_0, %c0_i32_1 : i32, i32, i32
  }
  func.func @transform_2(%arg0: i32, %arg1: i32) -> (i32, i32, i32) {
    %c0_i32 = arith.constant 0 : i32
    %c0_i32_0 = arith.constant 0 : i32
    %c0_i32_1 = arith.constant 0 : i32
    %c0_i32_2 = arith.constant 0 : i32
    return %c0_i32, %c0_i32_0, %c0_i32_1 : i32, i32, i32
  }
  func.func @transform_3(%arg0: i32, %arg1: i32) -> (i32, i32) {
    %c0_i32 = arith.constant 0 : i32
    %c0_i32_0 = arith.constant 0 : i32
    return %arg0, %c0_i32 : i32, i32
  }
}

</mosaic_0001>

<llo_original>
// kernel: tpu_custom_call.1
$region0: #{tpu_custom_call.1}
  #allocation0 [shape = 'u32[]', space=smem, size = 0x4, offset = 0x4, fixed_abs, tag = 'smem constant byte address 0x4 - core index']
  #allocation1 [shape = 'u32[144,128]{1,0:T(1,128)}', space=vmem, size = 0x12000, scoped, tag = 'internal scratch']
  #allocation2 [shape = 'f32[16,128]{1,0:T(8,128)}', space=vmem, size = 0x2000, scoped, tag = 'scratch operand']
  %s0 = inlined_call_operand.hbm [shape: f32[16,128], index: 0, kind: input, shape index: {}]
  %s1 = inlined_call_operand.hbm [shape: f32[3,3,128], index: 1, kind: input, shape index: {}]
  %s2 = inlined_call_operand.hbm [shape: bf16[2,128,128], index: 2, kind: input, shape index: {}]
  %s3 = inlined_call_operand.hbm [shape: f32[16,128], index: 3, kind: output, shape index: {}]
  %s4 = sld [smem:[#allocation0]]
  $region69: #{tpu_custom_call.1} parent=0
    _
  %s6 = ssub.s32 1, %s4
  %s7 = scalar_select 0, %s6, %s4
  $region1: #{tpu_custom_call.1} parent=0
    #allocation3 [shape = 'u8[8192]{0}', space=vmem, size = 0x2000, scoped, tag = 'input window, operand 0, single buffered']
    #allocation4 [shape = 's32[2]{0}', space=sflag, size = 0x8, scoped, tag = 'scoped memory for tpu_custom_call.1']
    #allocation5 [shape = 's32[2]{0}', space=sflag, size = 0x8, scoped, tag = 'scoped memory for tpu_custom_call.1']
    #allocation6 [shape = 'u8[6144]{0}', space=vmem, size = 0x1800, scoped, tag = 'input window, operand 1, single buffered']
    #allocation7 [shape = 's32[1]{0}', space=sflag, size = 0x4, scoped, tag = 'scoped memory for tpu_custom_call.1']
    #allocation8 [shape = 'u8[65536]{0}', space=vmem, size = 0x10000, scoped, tag = 'input window, operand 2, single buffered']
    #allocation9 [shape = 'u8[8192]{0}', space=vmem, size = 0x2000, scoped, tag = 'output window, operand 0, single buffered']
    %8 = vsyncpa [#allocation4], 0
    %9 = vsyncpa [#allocation7], 0
    %10 = vsyncpa [#allocation5], 0
    loop: start=0, step=1, limit=4
    $region2: #{tpu_custom_call.1} parent=1 // loop_pre_header
      _
    $region3: #{tpu_custom_call.1} parent=1 // loop_header
      %s12 = sphi 0, %s16
      %p13 = scmp.ge.s32.totalorder %s12, 4
      %s19 = sphi 0, %s31
      %s20 = sphi 0, %s27
      %s21 = sphi 0, %s19
      %s22 = sphi 0, %s20
      %s23 = sphi 0, %s21
      %s24 = sphi 0, %s22
      %s34 = sphi 0, %s36
      %s37 = sphi 0, %s34
      %s38 = sphi 0, %s37
      %s54 = sphi 0, %s38
      %s58 = sphi 0, %s58
      %s60 = sphi 0, %s58
      %s61 = sphi 0, %s60
      %s75 = sphi 0, %s61
      %s79 = sphi 0, %s79
      %s81 = sphi 0, %s79
      %s82 = sphi 0, %s81
      %s96 = sphi 0, %s82
      %s102 = sphi 0, %s104
      %s105 = sphi 0, %s102
      %s106 = sphi 0, %s105
      %s122 = sphi 0, %s106
    $region4: #{tpu_custom_call.1} parent=1 // loop_header_branch
      %15 = sbr.rel (%p13) target = $region8
    $region5: #{tpu_custom_call.1} parent=1 // loop_body
      %s17 = ssub.s32 %s12, 1
      %s18 = ssub.s32 %s12, 2
      %s25 = sadd.s32 1, %s20
      %p26 = scmp.ge.s32.totalorder %s25, 2
      %s27 = scalar_select %p26, 0, %s25
      %s28 = sadd.s32 1, %s19
      %s29 = scalar_select %p26, %s28, %s19
      %p30 = scmp.ge.s32.totalorder %s29, 1
      %s31 = scalar_select %p30, 0, %s29
      %s32 = ssub.s32 %s19, %s31
      %p33 = scmp.eq.s32.totalorder %s32, 0
      %s35 = sadd.s32 %s34, 1
      %s36 = scalar_select %p33, %s34, %s35
      %p39 = pneg %p33
      %p40 = scmp.eq.s32.totalorder %s12, 1
      %p41 = por %p39, %p40
      %p42 = scmp.ne.s32.totalorder %s34, %s37
      %p43 = scmp.eq.s32.totalorder %s12, 0
      %p44 = por %p42, %p43
      %p45 = scmp.ne.s32.totalorder %s34, %s37
      %p46 = scmp.eq.s32.totalorder %s17, 1
      %p47 = por %p45, %p46
      %p48 = scmp.ne.s32.totalorder %s37, %s38
      %p49 = scmp.eq.s32.totalorder %s17, 0
      %p50 = por %p48, %p49
      %p51 = scmp.ne.s32.totalorder %s37, %s38
      %p52 = scmp.eq.s32.totalorder %s18, 1
      %p53 = por %p51, %p52
      %p55 = scmp.ne.s32.totalorder %s38, %s54
      %p56 = scmp.eq.s32.totalorder %s18, 0
      %p57 = por %p55, %p56
      %s59 = sadd.s32 %s58, 1
      %p62 = scmp.eq.s32.totalorder %s12, 1
      %p63 = scmp.ne.s32.totalorder %s58, %s60
      %p64 = scmp.eq.s32.totalorder %s12, 0
      %p65 = por %p63, %p64
      %p66 = scmp.ne.s32.totalorder %s58, %s60
      %p67 = scmp.eq.s32.totalorder %s17, 1
      %p68 = por %p66, %p67
      %p69 = scmp.ne.s32.totalorder %s60, %s61
      %p70 = scmp.eq.s32.totalorder %s17, 0
      %p71 = por %p69, %p70
      %p72 = scmp.ne.s32.totalorder %s60, %s61
      %p73 = scmp.eq.s32.totalorder %s18, 1
      %p74 = por %p72, %p73
      %p76 = scmp.ne.s32.totalorder %s61, %s75
      %p77 = scmp.eq.s32.totalorder %s18, 0
      %p78 = por %p76, %p77
      %s80 = sadd.s32 %s79, 1
      %p83 = scmp.eq.s32.totalorder %s12, 1
      %p84 = scmp.ne.s32.totalorder %s79, %s81
      %p85 = scmp.eq.s32.totalorder %s12, 0
      %p86 = por %p84, %p85
      %p87 = scmp.ne.s32.totalorder %s79, %s81
      %p88 = scmp.eq.s32.totalorder %s17, 1
      %p89 = por %p87, %p88
      %p90 = scmp.ne.s32.totalorder %s81, %s82
      %p91 = scmp.eq.s32.totalorder %s17, 0
      %p92 = por %p90, %p91
      %p93 = scmp.ne.s32.totalorder %s81, %s82
      %p94 = scmp.eq.s32.totalorder %s18, 1
      %p95 = por %p93, %p94
      %p97 = scmp.ne.s32.totalorder %s82, %s96
      %p98 = scmp.eq.s32.totalorder %s18, 0
      %p99 = por %p97, %p98
      %s100 = ssub.s32 %s19, %s31
      %p101 = scmp.eq.s32.totalorder %s100, 0
      %s103 = sadd.s32 %s102, 1
      %s104 = scalar_select %p101, %s102, %s103
      %p107 = pneg %p101
      %p108 = scmp.eq.s32.totalorder %s12, 1
      %p109 = por %p107, %p108
      %p110 = scmp.ne.s32.totalorder %s102, %s105
      %p111 = scmp.eq.s32.totalorder %s12, 0
      %p112 = por %p110, %p111
      %p113 = scmp.ne.s32.totalorder %s102, %s105
      %p114 = scmp.eq.s32.totalorder %s17, 1
      %p115 = por %p113, %p114
      %p116 = scmp.ne.s32.totalorder %s105, %s106
      %p117 = scmp.eq.s32.totalorder %s17, 0
      %p118 = por %p116, %p117
      %p119 = scmp.ne.s32.totalorder %s105, %s106
      %p120 = scmp.eq.s32.totalorder %s18, 1
      %p121 = por %p119, %p120
      %p123 = scmp.ne.s32.totalorder %s106, %s122
      %p124 = scmp.eq.s32.totalorder %s18, 0
      %p125 = por %p123, %p124
      %p126 = scmp.le.s32.totalorder 1, %s12
      %p127 = scmp.lt.s32.totalorder %s12, 3
      %p128 = pnand %p126, %p127
      %p129 = pneg %p128
      // Predicated region
      $region9: #{tpu_custom_call.1} parent=5 // pred_check
        _
      $region10: #{tpu_custom_call.1} parent=5 // pred_check_branch
        %131 = sbr.rel (%p128) target = $region12
      $region11: #{tpu_custom_call.1} parent=5 // pred_region
        %s132 = ssub.s32 %s12, 1
        // Predicated region
        $region13: #{tpu_custom_call.1} parent=11 // pred_check
          %p133 = pneg %p50
        $region14: #{tpu_custom_call.1} parent=11 // pred_check_branch
          %135 = sbr.rel (%p133) target = $region16
        $region15: #{tpu_custom_call.1} parent=11 // pred_region
          %s136 = smul.u32 2, %s21
          %s138 = ssub.s32 256, 256
          %139 = vsyncadd [#allocation4], %s138
          %s140 = smul.addr %s136, 128
          %s141 = scalar_lea.hbm %s0, %s140
          %s142 = sshll.u32 [#allocation3], 4
          %s143 = int_to_ptr.vmem [resolvable:$true] %s142
          %148 = dma.hbm_to_vmem [thread:$0]  %s141, 256, %s143, [#allocation4], 128, 128, 8
        $region16: #{tpu_custom_call.1} parent=11 // pred_fallthru
          _
        // Predicated region
        $region17: #{tpu_custom_call.1} parent=11 // pred_check
          %p149 = pneg %p71
        $region18: #{tpu_custom_call.1} parent=11 // pred_check_branch
          %151 = sbr.rel (%p149) target = $region20
        $region19: #{tpu_custom_call.1} parent=11 // pred_region
          %s153 = ssub.s32 192, 192
          %154 = vsyncadd [#allocation7], %s153
          %s155 = sshll.u32 [#allocation6], 4
          %s156 = int_to_ptr.vmem [resolvable:$true] %s155
          %161 = dma.hbm_to_vmem [thread:$0]  %s1, 192, %s156, [#allocation7], 64, 64, 4
        $region20: #{tpu_custom_call.1} parent=11 // pred_fallthru
          _
        // Predicated region
        $region21: #{tpu_custom_call.1} parent=11 // pred_check
          %p162 = pneg %p92
        $region22: #{tpu_custom_call.1} parent=11 // pred_check_branch
          %164 = sbr.rel (%p162) target = $region24
        $region23: #{tpu_custom_call.1} parent=11 // pred_region
          %s166 = ssub.s32 2048, 2048
          %167 = vsyncadd [#allocation7], %s166
          %s168 = sshll.u32 [#allocation8], 4
          %s169 = int_to_ptr.vmem [resolvable:$true] %s168
          %174 = dma.hbm_to_vmem [thread:$0]  %s2, 2048, %s169, [#allocation7], 64, 64, 4
        $region24: #{tpu_custom_call.1} parent=11 // pred_fallthru
          _
      $region12: #{tpu_custom_call.1} parent=5 // pred_fallthru
        _
      %p175 = scmp.lt.s32.totalorder %s12, 2
      // Predicated region
      $region25: #{tpu_custom_call.1} parent=5 // pred_check
        %p176 = pneg %p175
      $region26: #{tpu_custom_call.1} parent=5 // pred_check_branch
        %178 = sbr.rel (%p176) target = $region28
      $region27: #{tpu_custom_call.1} parent=5 // pred_region
        _
      $region28: #{tpu_custom_call.1} parent=5 // pred_fallthru
        _
      %p179 = scmp.le.s32.totalorder 1, %s12
      %p180 = scmp.lt.s32.totalorder %s12, 3
      %p181 = pnand %p179, %p180
      %p182 = pneg %p181
      // Predicated region
      $region29: #{tpu_custom_call.1} parent=5 // pred_check
        _
      $region30: #{tpu_custom_call.1} parent=5 // pred_check_branch
        %184 = sbr.rel (%p181) target = $region32
      $region31: #{tpu_custom_call.1} parent=5 // pred_region
        %s185 = ssub.s32 %s12, 1
        // Predicated region
        $region33: #{tpu_custom_call.1} parent=31 // pred_check
          %p186 = pneg %p50
        $region34: #{tpu_custom_call.1} parent=31 // pred_check_branch
          %188 = sbr.rel (%p186) target = $region36
        $region35: #{tpu_custom_call.1} parent=31 // pred_region
          %189 = dma.done [#allocation4], 256
        $region36: #{tpu_custom_call.1} parent=31 // pred_fallthru
          _
        // Predicated region
        $region37: #{tpu_custom_call.1} parent=31 // pred_check
          %p190 = pneg %p71
        $region38: #{tpu_custom_call.1} parent=31 // pred_check_branch
          %192 = sbr.rel (%p190) target = $region40
        $region39: #{tpu_custom_call.1} parent=31 // pred_region
          %193 = dma.done [#allocation7], 192
        $region40: #{tpu_custom_call.1} parent=31 // pred_fallthru
          _
        // Predicated region
        $region41: #{tpu_custom_call.1} parent=31 // pred_check
          %p194 = pneg %p92
        $region42: #{tpu_custom_call.1} parent=31 // pred_check_branch
          %196 = sbr.rel (%p194) target = $region44
        $region43: #{tpu_custom_call.1} parent=31 // pred_region
          %197 = dma.done [#allocation7], 2048
        $region44: #{tpu_custom_call.1} parent=31 // pred_fallthru
          _
        %p198 = pneg %p50
        %p199 = pneg %p47
        %p200 = pneg %p71
        %p201 = pneg %p68
        %p202 = pneg %p92
        %p203 = pneg %p89
        %p204 = pneg %p118
        %p205 = pneg %p115
        %s206 = smul.u32 2, %s21
        %s207 = smul.u32 2, %s21
        %v209 = vlaneseq
        %v210 = vand.u32 %v209, 127
        %vm211 = vcmp.lt.s32.totalorder %v210, 32
        %p212 = scmp.eq.s32.totalorder %s22, 0
        // Predicated region
        $region45: #{tpu_custom_call.1} parent=31 // pred_check
          %p213 = pneg %p212
        $region46: #{tpu_custom_call.1} parent=31 // pred_check_branch
          %215 = sbr.rel (%p213) target = $region48
        $region47: #{tpu_custom_call.1} parent=31 // pred_region
          %v216 = vld [vmem:[#allocation3] sm:$0xff]
          %v217 = vld [vmem:[#allocation3 + $0x8] sm:$0xff]
          %218 = vst [vmem:[#allocation2] sm:$0xff] %v216
          %219 = vst [vmem:[#allocation2 + $0x8] sm:$0xff] %v217
        $region48: #{tpu_custom_call.1} parent=31 // pred_fallthru
          _
        %v220 = vld [vmem:[#allocation2] sm:$0xff]
        %v221 = vld [vmem:[#allocation2 + $0x8] sm:$0xff]
        %s222 = smul.u32 %s22, 4
        %s223 = scalar_lea.vmem [#allocation6], %s222
        %v224 = vld [vmem:[%s223] sm:$0x7]
        %225 = vadd.xlane.f32.xlu0 %v220
        %v226 = vpop.xlane.xlu0 %225
        %227 = vadd.xlane.f32.xlu0 %v221
        %v228 = vpop.xlane.xlu0 %227
        %v229 = vmul.f32 %v226, 0.03125
        %v230 = vmul.f32 %v228, 0.03125
        %v231 = vsub.f32 %v220, %v229
        %v232 = vsub.f32 %v221, %v230
        %v233 = vsel %vm211, %v231, 0.0
        %v234 = vsel %vm211, %v232, 0.0
        %v235 = vmul.f32 %v233, %v233
        %v236 = vmul.f32 %v234, %v234
        %237 = vadd.xlane.f32.xlu0 %v235
        %v238 = vpop.xlane.xlu0 %237
        %239 = vadd.xlane.f32.xlu0 %v236
        %v240 = vpop.xlane.xlu0 %239
        %v241 = vmul.f32 %v238, 0.032258064
        %v242 = vmul.f32 %v240, 0.032258064
        %v243 = vrsqrt.pop %v241
        %v244 = vmul.f32 %v241, %v243
        %vm245 = vcmp.eq.f32.partialorder %v241, inf
        %v246 = vsel %vm245, %v241, %v244
        %vm247 = vcmp.eq.f32.partialorder %v241, 0.0
        %v248 = vand.u32 %v241, 2147483648
        %v249 = vsel %vm247, %v248, %v246
        %v250 = vrsqrt.pop %v242
        %v251 = vmul.f32 %v242, %v250
        %vm252 = vcmp.eq.f32.partialorder %v242, inf
        %v253 = vsel %vm252, %v242, %v251
        %vm254 = vcmp.eq.f32.partialorder %v242, 0.0
        %v255 = vand.u32 %v242, 2147483648
        %v256 = vsel %vm254, %v255, %v253
        %v257 = vadd.f32 %v249, 1e-06
        %v258 = vadd.f32 %v256, 1e-06
        %v259 = vrcp.pop %v257
        %v260 = vrcp.pop %v258
        %v261 = vmul.f32 %v233, %v259
        %v262 = vmul.f32 %v234, %v260
        %v263 = vlaneseq
        %v264 = vshrl.u32 %v263, 7
        %v265 = vsub.s32 0, %v264
        %v266 = vrot.slane %v224, %v265
        %v267 = vmul.f32 %v266, %v261
        %v268 = vmul.f32 %v266, %v262
        %v269 = vlaneseq
        %v270 = vshrl.u32 %v269, 7
        %v271 = vsub.s32 1, %v270
        %v272 = vrot.slane %v224, %v271
        %v273 = vadd.f32 %v267, %v272
        %v274 = vadd.f32 %v268, %v272
        %s275 = smul.u32 %s22, 16
        %s276 = smul.addr %s275, 4
        %s277 = scalar_lea.vmem [#allocation8], %s276
        %v278 = vld [vmem:[%s277] sm:$0xf]
        %v279 = vld [vmem:[%s277 + $0x4] sm:$0xf]
        %v280 = vld [vmem:[%s277 + $0x8] sm:$0xf]
        %v281 = vld [vmem:[%s277 + $0xc] sm:$0xf]
        %v282 = vld [vmem:[%s277 + $0x10] sm:$0xf]
        %v283 = vld [vmem:[%s277 + $0x14] sm:$0xf]
        %v284 = vld [vmem:[%s277 + $0x18] sm:$0xf]
        %v285 = vld [vmem:[%s277 + $0x1c] sm:$0xf]
        %v286 = vld [vmem:[%s277 + $0x20] sm:$0xf]
        %v287 = vld [vmem:[%s277 + $0x24] sm:$0xf]
        %v288 = vld [vmem:[%s277 + $0x28] sm:$0xf]
        %v289 = vld [vmem:[%s277 + $0x2c] sm:$0xf]
        %v290 = vld [vmem:[%s277 + $0x30] sm:$0xf]
        %v291 = vld [vmem:[%s277 + $0x34] sm:$0xf]
        %v292 = vld [vmem:[%s277 + $0x38] sm:$0xf]
        %v293 = vld [vmem:[%s277 + $0x3c] sm:$0xf]
        %v294 = vpack.c.bf16 %v274, %v273
        %v295 = vlaneseq
        %v296 = vshrl.u32 %v295, 7
        %v297 = vsub.s32 2, %v296
        %v298 = vrot.slane %v224, %v297
        %v315 = vunpack.c.l.b16 %v278
        %v316 = vunpack.c.l.b16 %v279
        %v317 = vunpack.c.l.b16 %v280
        %v318 = vunpack.c.l.b16 %v281
        %v319 = vunpack.c.l.b16 %v282
        %v320 = vunpack.c.l.b16 %v283
        %v321 = vunpack.c.l.b16 %v284
        %v322 = vunpack.c.l.b16 %v285
        %v323 = vunpack.c.l.b16 %v286
        %v324 = vunpack.c.l.b16 %v287
        %v325 = vunpack.c.l.b16 %v288
        %v326 = vunpack.c.l.b16 %v289
        %v327 = vunpack.c.l.b16 %v290
        %v328 = vunpack.c.l.b16 %v291
        %v329 = vunpack.c.l.b16 %v292
        %v330 = vunpack.c.l.b16 %v293
        %v331 = vpack.c.b16 %v316, %v315
        %v332 = vpack.c.b16 %v318, %v317
        %v333 = vpack.c.b16 %v320, %v319
        %v334 = vpack.c.b16 %v322, %v321
        %v335 = vpack.c.b16 %v324, %v323
        %v336 = vpack.c.b16 %v326, %v325
        %v337 = vpack.c.b16 %v328, %v327
        %v338 = vpack.c.b16 %v330, %v329
        %347 = vmatprep.subr.bf16.mxu0 0
        %348 = vmatpush1.bf16.msra.mxu0 %v338
        %349 = vmatprep.subr.bf16.mxu0 0
        %350 = vmatpush1.bf16.msra.mxu0 %v337
        %351 = vmatprep.subr.bf16.mxu0 0
        %352 = vmatpush1.bf16.msra.mxu0 %v336
        %353 = vmatprep.subr.bf16.mxu0 0
        %354 = vmatpush1.bf16.msra.mxu0 %v335
        %355 = vmatprep.subr.bf16.mxu0 0
        %356 = vmatpush1.bf16.msra.mxu0 %v334
        %357 = vmatprep.subr.bf16.mxu0 0
        %358 = vmatpush1.bf16.msra.mxu0 %v333
        %359 = vmatprep.subr.bf16.mxu0 0
        %360 = vmatpush1.bf16.msra.mxu0 %v332
        %361 = vmatprep.subr.bf16.mxu0 0
        %362 = vmatpush1.bf16.msra.mxu0 %v331
        %363 = vmatprep.subr.bf16.mxu0 0
        %364 = vmatpush2.bf16.msra.mxu0 0
        %365 = vmatprep.subr.bf16.mxu0 0
        %366 = vmatpush2.bf16.msra.mxu0 0
        %367 = vmatprep.subr.bf16.mxu0 0
        %368 = vmatpush2.bf16.msra.mxu0 0
        %369 = vmatprep.subr.bf16.mxu0 0
        %370 = vmatpush2.bf16.msra.mxu0 0
        %371 = vmatprep.subr.bf16.mxu0 0
        %372 = vmatpush2.bf16.msra.mxu0 0
        %373 = vmatprep.subr.bf16.mxu0 0
        %374 = vmatpush2.bf16.msra.mxu0 0
        %375 = vmatprep.subr.bf16.mxu0 0
        %376 = vmatpush2.bf16.msra.mxu0 0
        %377 = vmatprep.subr.bf16.mxu0 0
        %378 = vmatpush2.bf16.msra.mxu0 0
        %379 = vmatprep.mubr.bf16.mxu0 0
        %380 = vmatmul.mubr.bf16.gmra.mxu0 %v294
        %v381 = vpop.f32.mrf.mxu0
        %v382 = vadd.f32 %v298, %v381
        %v383 = vpop.f32.mrf.mxu0
        %v384 = vpop.f32.mrf.mxu0
        %v385 = vadd.f32 %v298, %v384
        %v386 = vpop.f32.mrf.mxu0
        %387 = vdwg.mxu0
        %v388 = vadd.f32 %v220, %v382
        %v389 = vadd.f32 %v221, %v385
        %p390 = scmp.ne.s32.totalorder %s22, 1
        // Predicated region
        $region49: #{tpu_custom_call.1} parent=31 // pred_check
          %p391 = pneg %p390
        $region50: #{tpu_custom_call.1} parent=31 // pred_check_branch
          %393 = sbr.rel (%p391) target = $region52
        $region51: #{tpu_custom_call.1} parent=31 // pred_region
          %394 = vst [vmem:[#allocation2] sm:$0xff] %v388
          %395 = vst [vmem:[#allocation2 + $0x8] sm:$0xff] %v389
        $region52: #{tpu_custom_call.1} parent=31 // pred_fallthru
          _
        %p396 = scmp.eq.s32.totalorder %s22, 1
        // Predicated region
        $region53: #{tpu_custom_call.1} parent=31 // pred_check
          %p397 = pneg %p396
        $region54: #{tpu_custom_call.1} parent=31 // pred_check_branch
          %399 = sbr.rel (%p397) target = $region56
        $region55: #{tpu_custom_call.1} parent=31 // pred_region
          %s400 = scalar_lea.vmem [#allocation6], 8
          %v401 = vld [vmem:[%s400] sm:$0x7]
          %402 = vadd.xlane.f32.xlu0 %v388
          %v403 = vpop.xlane.xlu0 %402
          %404 = vadd.xlane.f32.xlu0 %v389
          %v405 = vpop.xlane.xlu0 %404
          %v406 = vmul.f32 %v403, 0.03125
          %v407 = vmul.f32 %v405, 0.03125
          %v408 = vsub.f32 %v388, %v406
          %v409 = vsub.f32 %v389, %v407
          %v410 = vsel %vm211, %v408, 0.0
          %v411 = vsel %vm211, %v409, 0.0
          %v412 = vmul.f32 %v410, %v410
          %v413 = vmul.f32 %v411, %v411
          %414 = vadd.xlane.f32.xlu0 %v412
          %v415 = vpop.xlane.xlu0 %414
          %416 = vadd.xlane.f32.xlu0 %v413
          %v417 = vpop.xlane.xlu0 %416
          %v418 = vmul.f32 %v415, 0.032258064
          %v419 = vmul.f32 %v417, 0.032258064
          %v420 = vrsqrt.pop %v418
          %v421 = vmul.f32 %v418, %v420
          %vm422 = vcmp.eq.f32.partialorder %v418, inf
          %v423 = vsel %vm422, %v418, %v421
          %vm424 = vcmp.eq.f32.partialorder %v418, 0.0
          %v425 = vand.u32 %v418, 2147483648
          %v426 = vsel %vm424, %v425, %v423
          %v427 = vrsqrt.pop %v419
          %v428 = vmul.f32 %v419, %v427
          %vm429 = vcmp.eq.f32.partialorder %v419, inf
          %v430 = vsel %vm429, %v419, %v428
          %vm431 = vcmp.eq.f32.partialorder %v419, 0.0
          %v432 = vand.u32 %v419, 2147483648
          %v433 = vsel %vm431, %v432, %v430
          %v434 = vadd.f32 %v426, 1e-06
          %v435 = vadd.f32 %v433, 1e-06
          %v436 = vrcp.pop %v434
          %v437 = vrcp.pop %v435
          %v438 = vmul.f32 %v410, %v436
          %v439 = vmul.f32 %v411, %v437
          %v440 = vlaneseq
          %v441 = vshrl.u32 %v440, 7
          %v442 = vsub.s32 0, %v441
          %v443 = vrot.slane %v401, %v442
          %v444 = vmul.f32 %v443, %v438
          %v445 = vmul.f32 %v443, %v439
          %v446 = vlaneseq
          %v447 = vshrl.u32 %v446, 7
          %v448 = vsub.s32 1, %v447
          %v449 = vrot.slane %v401, %v448
          %v450 = vadd.f32 %v444, %v449
          %v451 = vadd.f32 %v445, %v449
          %452 = vst [vmem:[#allocation9] sm:$0xff] %v450
          %453 = vst [vmem:[#allocation9 + $0x8] sm:$0xff] %v451
        $region56: #{tpu_custom_call.1} parent=31 // pred_fallthru
          _
        // Predicated region
        $region57: #{tpu_custom_call.1} parent=31 // pred_check
          %p454 = pneg %p115
        $region58: #{tpu_custom_call.1} parent=31 // pred_check_branch
          %456 = sbr.rel (%p454) target = $region60
        $region59: #{tpu_custom_call.1} parent=31 // pred_region
          %s457 = smul.u32 2, %s21
          %s459 = ssub.s32 256, 256
          %460 = vsyncadd [#allocation5], %s459
          %s461 = smul.addr %s457, 128
          %s462 = scalar_lea.hbm %s3, %s461
          %s463 = sshll.u32 [#allocation9], 4
          %s464 = int_to_ptr.vmem [resolvable:$true] %s463
          %469 = dma.vmem_to_hbm [thread:$0]  %s464, 256, %s462, [#allocation5], 128, 128, 8
        $region60: #{tpu_custom_call.1} parent=31 // pred_fallthru
          _
        // Predicated region
        $region61: #{tpu_custom_call.1} parent=31 // pred_check
          %p470 = pneg %p115
        $region62: #{tpu_custom_call.1} parent=31 // pred_check_branch
          %472 = sbr.rel (%p470) target = $region64
        $region63: #{tpu_custom_call.1} parent=31 // pred_region
          %473 = dma.done [#allocation5], 256
        $region64: #{tpu_custom_call.1} parent=31 // pred_fallthru
          _
      $region32: #{tpu_custom_call.1} parent=5 // pred_fallthru
        _
      %p474 = scmp.le.s32.totalorder 2, %s12
      // Predicated region
      $region65: #{tpu_custom_call.1} parent=5 // pred_check
        %p475 = pneg %p474
      $region66: #{tpu_custom_call.1} parent=5 // pred_check_branch
        %477 = sbr.rel (%p475) target = $region68
      $region67: #{tpu_custom_call.1} parent=5 // pred_region
        %s478 = ssub.s32 %s12, 2
      $region68: #{tpu_custom_call.1} parent=5 // pred_fallthru
        _
    $region6: #{tpu_custom_call.1} parent=1 // loop_footer
      %s16 = sadd.s32 1, %s12
    $region7: #{tpu_custom_call.1} parent=1 // loop_footer_branch
      %11 = sbr.rel target = $region3
    $region8: #{tpu_custom_call.1} parent=1 // loop_exit
      _
    %479 = vsyncpa [#allocation4], 1
    %s480 = scalar_lea.sflag [#allocation4], 1
    %481 = vsyncpa %s480, 1
    %482 = vsyncpa [#allocation7], 1
    %483 = vsyncpa [#allocation5], 1
    %s484 = scalar_lea.sflag [#allocation5], 1
    %485 = vsyncpa %s484, 1

</llo_original>
